<compile_context>
chip_gen: v7x
topology: tpu7x:2x2x1
jax: 0.10.0
libtpu: 0.0.40
codegen_flags: <defaults>
</compile_context>

<pallas_src>
import functools
import math

import jax
import jax.numpy as jnp
from jax.experimental import pallas as pl
from jax.experimental.pallas import tpu as pltpu


def _round_up(x, m):
    return ((x + m - 1) // m) * m


def _ffn_kernel(x_ref, w1_ref, b1_ref, w2_ref, b2_ref, o_ref, acc_ref):
    """Grid = (row_tiles, hidden_tiles).

    For hidden tile j:
        h_j  = relu(x @ W1[:, j_tile] + b1[j_tile])        (f32)
        acc += h_j @ W2[j_tile, :]                          (f32 accumulate)
    acc is initialized with b2 at j == 0 and stored at the last j.
    """
    j = pl.program_id(1)

    @pl.when(j == 0)
    def _init():
        # Fold the second bias into the accumulator init (b2 is already f32).
        acc_ref[...] = jnp.broadcast_to(b2_ref[...], acc_ref.shape)

    # First linear for this hidden tile (MXU, f32 accumulation).
    h = jnp.dot(x_ref[...], w1_ref[...], preferred_element_type=jnp.float32)
    # Bias add + ReLU stay in f32 on the VPU (v5e has no bf16 VPU).
    h = jnp.maximum(h + b1_ref[...], 0.0)

    # Second linear: accumulate this hidden tile's contribution.
    acc_ref[...] += jnp.dot(h.astype(w2_ref.dtype), w2_ref[...],
                            preferred_element_type=jnp.float32)

    @pl.when(j == pl.num_programs(1) - 1)
    def _finalize():
        o_ref[...] = acc_ref[...].astype(o_ref.dtype)


@functools.partial(jax.jit,
                   static_argnames=("block_m", "block_h", "mxu_dtype"))
def feed_forward(x, w1, b1, w2, b2, *, block_m=256, block_h=512,
                 mxu_dtype=None):
    """x: (..., fan_in) -> (..., fan_out).

    mxu_dtype: optional dtype for the matmul operands (e.g. jnp.bfloat16 on
    v6e/v7x). Accumulation, bias add and ReLU are always f32; output keeps
    x.dtype.
    """
    orig_shape = x.shape
    out_dtype = x.dtype
    fan_in = orig_shape[-1]
    hidden = w1.shape[1]
    fan_out = w2.shape[1]

    x2d = x.reshape(-1, fan_in)
    m = x2d.shape[0]

    # ---- tile sizes -----------------------------------------------------
    # Row tile sized to fill the MXU LHS; shrink for tiny inputs so we don't
    # pad e.g. 16 rows up to 256. Arbitrary m handled by zero-padding.
    bm = min(block_m, _round_up(m, 8))
    m_pad = _round_up(m, bm)

    # Feature dims padded to 128 lanes -> lane-dense stores, full MXU cols.
    fan_in_p = _round_up(fan_in, 128)
    fan_out_p = _round_up(fan_out, 128)
    bh = min(block_h, _round_up(hidden, 128))
    hidden_p = _round_up(hidden, bh)

    # ---- host-side dtype prep + zero padding (exact for this op) --------
    op_dtype = out_dtype if mxu_dtype is None else mxu_dtype
    xp = jnp.zeros((m_pad, fan_in_p), op_dtype).at[:m, :fan_in].set(
        x2d.astype(op_dtype))
    w1p = jnp.zeros((fan_in_p, hidden_p), op_dtype).at[:fan_in, :hidden].set(
        w1.astype(op_dtype))
    w2p = jnp.zeros((hidden_p, fan_out_p), op_dtype).at[:hidden, :fan_out].set(
        w2.astype(op_dtype))
    # Biases pre-cast to f32 once (kernel elementwise math is f32).
    b1p = jnp.zeros((1, hidden_p), jnp.float32).at[0, :hidden].set(
        b1.astype(jnp.float32))
    b2p = jnp.zeros((1, fan_out_p), jnp.float32).at[0, :fan_out].set(
        b2.astype(jnp.float32))

    grid = (m_pad // bm, hidden_p // bh)

    itemsize = jnp.dtype(op_dtype).itemsize
    cost = pl.CostEstimate(
        flops=2 * m_pad * (fan_in_p * hidden_p + hidden_p * fan_out_p),
        transcendentals=0,
        bytes_accessed=(
            (m_pad * fan_in_p + fan_in_p * hidden_p + hidden_p * fan_out_p)
            * itemsize
            + (hidden_p + fan_out_p) * 4
            + m_pad * fan_out_p * jnp.dtype(out_dtype).itemsize),
    )

    out_p = pl.pallas_call(
        _ffn_kernel,
        out_shape=jax.ShapeDtypeStruct((m_pad, fan_out_p), out_dtype),
        grid_spec=pltpu.PrefetchScalarGridSpec(
            num_scalar_prefetch=0,
            grid=grid,
            in_specs=[
                pl.BlockSpec((bm, fan_in_p), lambda i, j: (i, 0)),    # x rows
                pl.BlockSpec((fan_in_p, bh), lambda i, j: (0, j)),    # W1 cols
                pl.BlockSpec((1, bh), lambda i, j: (0, j)),           # b1
                pl.BlockSpec((bh, fan_out_p), lambda i, j: (j, 0)),   # W2 rows
                pl.BlockSpec((1, fan_out_p), lambda i, j: (0, 0)),    # b2
            ],
            out_specs=pl.BlockSpec((bm, fan_out_p), lambda i, j: (i, 0)),
            scratch_shapes=[pltpu.VMEM((bm, fan_out_p), jnp.float32)],
        ),
        compiler_params=pltpu.CompilerParams(
            dimension_semantics=("parallel", "arbitrary")),
        cost_estimate=cost,
    )(xp, w1p, b1p, w2p, b2p)

    return out_p[:m, :fan_out].reshape(*orig_shape[:-1], fan_out)


def init_params(key, fan_in, fan_out, dtype=jnp.float32):
    """Deterministic init mirroring nn.Linear defaults: U(-1/sqrt(in), 1/sqrt(in))."""
    hidden = 4 * fan_out
    k1, k2, k3, k4 = jax.random.split(key, 4)
    bound1 = 1.0 / math.sqrt(fan_in)
    bound2 = 1.0 / math.sqrt(hidden)
    w1 = jax.random.uniform(k1, (fan_in, hidden), dtype, -bound1, bound1)
    b1 = jax.random.uniform(k2, (hidden,), dtype, -bound1, bound1)
    w2 = jax.random.uniform(k3, (hidden, fan_out), dtype, -bound2, bound2)
    b2 = jax.random.uniform(k4, (fan_out,), dtype, -bound2, bound2)
    return w1, b1, w2, b2


if __name__ == "__main__":
    # Small GPT-ish shapes: batch=2, seq=8, fan_in=fan_out=32 (hidden=128).
    B, T, FAN_IN, FAN_OUT = 2, 8, 32, 32
    key = jax.random.PRNGKey(0)
    kx, kp = jax.random.split(key)

    x = jax.random.normal(kx, (B, T, FAN_IN), dtype=jnp.float32)
    w1, b1, w2, b2 = init_params(kp, FAN_IN, FAN_OUT)

    # Pure-JAX reference.
    ref = jnp.maximum(x @ w1 + b1, 0.0) @ w2 + b2

    # f32 path (default): tight tolerance.
    out = jax.block_until_ready(feed_forward(x, w1, b1, w2, b2))
    assert out.shape == (B, T, FAN_OUT)
    assert jnp.allclose(out, ref, atol=1e-5, rtol=1e-5)

    # bf16-MXU path (v6e/v7x fast path): looser tolerance (bf16 operands).
    out_bf16 = jax.block_until_ready(
        feed_forward(x, w1, b1, w2, b2, mxu_dtype=jnp.bfloat16))
    assert out_bf16.shape == (B, T, FAN_OUT)
    assert jnp.allclose(out_bf16, ref, atol=1e-1, rtol=1e-1)

    print("KERNEL_OK")
</pallas_src>

<mosaic_0001>
module attributes {stable_mosaic.version = 11 : i64} {
  func.func @_ffn_kernel(%arg0: i32, %arg1: i32, %arg2: memref<16x128xf32, #tpu.memory_space<vmem>>, %arg3: memref<128x128xf32, #tpu.memory_space<vmem>>, %arg4: memref<1x128xf32, #tpu.memory_space<vmem>>, %arg5: memref<128x128xf32, #tpu.memory_space<vmem>>, %arg6: memref<1x128xf32, #tpu.memory_space<vmem>>, %arg7: memref<16x128xf32, #tpu.memory_space<vmem>>, %arg8: memref<16x128xf32, #tpu.memory_space<vmem>>) attributes {dimension_semantics = [#tpu.dimension_semantics<parallel>, #tpu.dimension_semantics<arbitrary>], iteration_bounds = array<i64: 1, 1>, scalar_prefetch = 0 : i64, scratch_operands = 1 : i64, tpu.core_type = #tpu.core_type<tc>, window_params = [{transform_indices = @transform_0, window_bounds = array<i64: 16, 128>}, {transform_indices = @transform_1, window_bounds = array<i64: 128, 128>}, {transform_indices = @transform_2, window_bounds = array<i64: 1, 128>}, {transform_indices = @transform_3, window_bounds = array<i64: 128, 128>}, {pipeline_mode = #tpu.pipeline_mode<synchronous>, transform_indices = @transform_4, window_bounds = array<i64: 1, 128>}, {transform_indices = @transform_5, window_bounds = array<i64: 16, 128>}]} {
    %c0_i32 = arith.constant 0 : i32
    %0 = arith.cmpi eq, %arg1, %c0_i32 : i32
    %1 = arith.extui %0 : i1 to i32
    %c0_i32_0 = arith.constant 0 : i32
    %2 = arith.cmpi ne, %1, %c0_i32_0 : i32
    scf.if %2 {
      %c0_16 = arith.constant 0 : index
      %c0_17 = arith.constant 0 : index
      %19 = vector.load %arg6[%c0_16, %c0_17] : memref<1x128xf32, #tpu.memory_space<vmem>>, vector<1x128xf32>
      %20 = vector.shape_cast %19 : vector<1x128xf32> to vector<1x128xf32>
      %21 = vector.broadcast %20 : vector<1x128xf32> to vector<16x128xf32>
      %c0_18 = arith.constant 0 : index
      %c0_19 = arith.constant 0 : index
      %22 = vector.load %arg8[%c0_18, %c0_19] : memref<16x128xf32, #tpu.memory_space<vmem>>, vector<16x128xf32>
      tpu.vector_store %arg8[%c0_18, %c0_19], %21 {strides = array<i32>} : memref<16x128xf32, #tpu.memory_space<vmem>>, vector<16x128xf32>,
    } else {
    }
    %c0 = arith.constant 0 : index
    %c0_1 = arith.constant 0 : index
    %3 = vector.load %arg2[%c0, %c0_1] : memref<16x128xf32, #tpu.memory_space<vmem>>, vector<16x128xf32>
    %c0_2 = arith.constant 0 : index
    %c0_3 = arith.constant 0 : index
    %4 = vector.load %arg3[%c0_2, %c0_3] : memref<128x128xf32, #tpu.memory_space<vmem>>, vector<128x128xf32>
    %cst = arith.constant dense<0.000000e+00> : vector<16x128xf32>
    %5 = tpu.matmul %3, %4, %cst {dimension_numbers = #tpu.dot_dimension_numbers<[1], [0], [0], [1], [0, 0, 1, 1], [], []>} : vector<16x128xf32>, vector<128x128xf32>, vector<16x128xf32> -> vector<16x128xf32>
    %c0_4 = arith.constant 0 : index
    %c0_5 = arith.constant 0 : index
    %6 = vector.load %arg4[%c0_4, %c0_5] : memref<1x128xf32, #tpu.memory_space<vmem>>, vector<1x128xf32>
    %7 = vector.broadcast %6 : vector<1x128xf32> to vector<16x128xf32>
    %8 = arith.addf %5, %7 : vector<16x128xf32>
    %cst_6 = arith.constant 0.000000e+00 : f32
    %9 = vector.broadcast %cst_6 : f32 to vector<16x128xf32>
    %10 = arith.maximumf %8, %9 : vector<16x128xf32>
    %c0_7 = arith.constant 0 : index
    %c0_8 = arith.constant 0 : index
    %11 = vector.load %arg8[%c0_7, %c0_8] : memref<16x128xf32, #tpu.memory_space<vmem>>, vector<16x128xf32>
    %c0_9 = arith.constant 0 : index
    %c0_10 = arith.constant 0 : index
    %12 = vector.load %arg5[%c0_9, %c0_10] : memref<128x128xf32, #tpu.memory_space<vmem>>, vector<128x128xf32>
    %cst_11 = arith.constant dense<0.000000e+00> : vector<16x128xf32>
    %13 = tpu.matmul %10, %12, %cst_11 {dimension_numbers = #tpu.dot_dimension_numbers<[1], [0], [0], [1], [0, 0, 1, 1], [], []>} : vector<16x128xf32>, vector<128x128xf32>, vector<16x128xf32> -> vector<16x128xf32>
    %14 = arith.addf %11, %13 : vector<16x128xf32>
    %c0_12 = arith.constant 0 : index
    %c0_13 = arith.constant 0 : index
    %15 = vector.load %arg8[%c0_12, %c0_13] : memref<16x128xf32, #tpu.memory_space<vmem>>, vector<16x128xf32>
    tpu.vector_store %arg8[%c0_12, %c0_13], %14 {strides = array<i32>} : memref<16x128xf32, #tpu.memory_space<vmem>>, vector<16x128xf32>,
    %c0_i32_14 = arith.constant 0 : i32
    %16 = arith.cmpi eq, %arg1, %c0_i32_14 : i32
    %17 = arith.extui %16 : i1 to i32
    %c0_i32_15 = arith.constant 0 : i32
    %18 = arith.cmpi ne, %17, %c0_i32_15 : i32
    scf.if %18 {
      %c0_16 = arith.constant 0 : index
      %c0_17 = arith.constant 0 : index
      %19 = vector.load %arg8[%c0_16, %c0_17] : memref<16x128xf32, #tpu.memory_space<vmem>>, vector<16x128xf32>
      %c0_18 = arith.constant 0 : index
      %c0_19 = arith.constant 0 : index
      %20 = vector.load %arg7[%c0_18, %c0_19] : memref<16x128xf32, #tpu.memory_space<vmem>>, vector<16x128xf32>
      tpu.vector_store %arg7[%c0_18, %c0_19], %19 {strides = array<i32>} : memref<16x128xf32, #tpu.memory_space<vmem>>, vector<16x128xf32>,
    } else {
    }
    return
  }
  func.func @transform_0(%arg0: i32, %arg1: i32) -> (i32, i32) {
    %c0_i32 = arith.constant 0 : i32
    %c0_i32_0 = arith.constant 0 : i32
    return %arg0, %c0_i32 : i32, i32
  }
  func.func @transform_1(%arg0: i32, %arg1: i32) -> (i32, i32) {
    %c0_i32 = arith.constant 0 : i32
    %c0_i32_0 = arith.constant 0 : i32
    return %c0_i32, %arg1 : i32, i32
  }
  func.func @transform_2(%arg0: i32, %arg1: i32) -> (i32, i32) {
    %c0_i32 = arith.constant 0 : i32
    %c0_i32_0 = arith.constant 0 : i32
    return %c0_i32, %arg1 : i32, i32
  }
  func.func @transform_3(%arg0: i32, %arg1: i32) -> (i32, i32) {
    %c0_i32 = arith.constant 0 : i32
    %c0_i32_0 = arith.constant 0 : i32
    return %arg1, %c0_i32 : i32, i32
  }
  func.func @transform_4(%arg0: i32, %arg1: i32) -> (i32, i32) {
    %c0_i32 = arith.constant 0 : i32
    %c0_i32_0 = arith.constant 0 : i32
    %c0_i32_1 = arith.constant 0 : i32
    return %c0_i32, %c0_i32_0 : i32, i32
  }
  func.func @transform_5(%arg0: i32, %arg1: i32) -> (i32, i32) {
    %c0_i32 = arith.constant 0 : i32
    %c0_i32_0 = arith.constant 0 : i32
    return %arg0, %c0_i32 : i32, i32
  }
}

</mosaic_0001>

<llo_original>
// kernel: feed_forward.1
$region0: #{feed_forward.1}
  #allocation0 [shape = 'u32[]', space=smem, size = 0x4, offset = 0x4, fixed_abs, tag = 'smem constant byte address 0x4 - core index']
  #allocation1 [shape = 'u32[144,128]{1,0:T(1,128)}', space=vmem, size = 0x12000, scoped, tag = 'internal scratch']
  #allocation2 [shape = 'f32[16,128]{1,0:T(8,128)}', space=vmem, size = 0x2000, scoped, tag = 'scratch operand']
  %s0 = inlined_call_operand.vmem [shape: f32[16,128], index: 0, kind: input, shape index: {}]
  %s1 = inlined_call_operand.vmem [shape: f32[128,128], index: 1, kind: input, shape index: {}]
  %s2 = inlined_call_operand.vmem [shape: f32[1,128], index: 2, kind: input, shape index: {}]
  %s3 = inlined_call_operand.vmem [shape: f32[128,128], index: 3, kind: input, shape index: {}]
  %s4 = inlined_call_operand.vmem [shape: f32[1,128], index: 4, kind: input, shape index: {}]
  %s5 = inlined_call_operand.vmem [shape: f32[16,128], index: 5, kind: output, shape index: {}]
  %s6 = sld [smem:[#allocation0]]
  $region38: #{feed_forward.1} parent=0
    _
  %s8 = ssub.s32 1, %s6
  %s9 = scalar_select 0, %s8, %s6
  // Predicated region
  $region2: #{feed_forward.1} parent=0 // pred_check
    _
  $region3: #{feed_forward.1} parent=0 // pred_check_branch
    %11 = sbr.rel (0) target = $region5
  $region4: #{feed_forward.1} parent=0 // pred_region
    _
  $region5: #{feed_forward.1} parent=0 // pred_fallthru
    _
  // Predicated region
  $region6: #{feed_forward.1} parent=0 // pred_check
    _
  $region7: #{feed_forward.1} parent=0 // pred_check_branch
    %13 = sbr.rel (0) target = $region9
  $region8: #{feed_forward.1} parent=0 // pred_region
    _
  $region9: #{feed_forward.1} parent=0 // pred_fallthru
    _
  // Predicated region
  $region10: #{feed_forward.1} parent=0 // pred_check
    _
  $region11: #{feed_forward.1} parent=0 // pred_check_branch
    %15 = sbr.rel (0) target = $region13
  $region12: #{feed_forward.1} parent=0 // pred_region
    _
  $region13: #{feed_forward.1} parent=0 // pred_fallthru
    _
  // Predicated region
  $region14: #{feed_forward.1} parent=0 // pred_check
    _
  $region15: #{feed_forward.1} parent=0 // pred_check_branch
    %17 = sbr.rel (0) target = $region17
  $region16: #{feed_forward.1} parent=0 // pred_region
    _
  $region17: #{feed_forward.1} parent=0 // pred_fallthru
    _
  // Predicated region
  $region18: #{feed_forward.1} parent=0 // pred_check
    _
  $region19: #{feed_forward.1} parent=0 // pred_check_branch
    %19 = sbr.rel (0) target = $region21
  $region20: #{feed_forward.1} parent=0 // pred_region
    _
  $region21: #{feed_forward.1} parent=0 // pred_fallthru
    _
  %p20 = scmp.eq.s32.totalorder 0, 0
  // Predicated region
  $region22: #{feed_forward.1} parent=0 // pred_check
    %p21 = pneg %p20
  $region23: #{feed_forward.1} parent=0 // pred_check_branch
    %23 = sbr.rel (%p21) target = $region25
  $region24: #{feed_forward.1} parent=0 // pred_region
    %v24 = vld [vmem:[%s4] sm:$0x1]
    %v26 = vlaneseq
    %v27 = vshrl.u32 %v26, 7
    %v28 = vsub.s32 0, %v27
    %v29 = vrot.slane %v24, %v28
    %31 = vst [vmem:[#allocation2] sm:$0xff] %v29
    %32 = vst [vmem:[#allocation2 + $0x8] sm:$0xff] %v29
  $region25: #{feed_forward.1} parent=0 // pred_fallthru
    _
  %v33 = vld [vmem:[%s0] sm:$0xff]
  %v34 = vld [vmem:[%s0 + $0x8] sm:$0xff]
  %v35 = vld [vmem:[%s1] sm:$0xff]
  %v36 = vld [vmem:[%s1 + $0x8] sm:$0xff]
  %v37 = vld [vmem:[%s1 + $0x10] sm:$0xff]
  %v38 = vld [vmem:[%s1 + $0x18] sm:$0xff]
  %v39 = vld [vmem:[%s1 + $0x20] sm:$0xff]
  %v40 = vld [vmem:[%s1 + $0x28] sm:$0xff]
  %v41 = vld [vmem:[%s1 + $0x30] sm:$0xff]
  %v42 = vld [vmem:[%s1 + $0x38] sm:$0xff]
  %v43 = vld [vmem:[%s1 + $0x40] sm:$0xff]
  %v44 = vld [vmem:[%s1 + $0x48] sm:$0xff]
  %v45 = vld [vmem:[%s1 + $0x50] sm:$0xff]
  %v46 = vld [vmem:[%s1 + $0x58] sm:$0xff]
  %v47 = vld [vmem:[%s1 + $0x60] sm:$0xff]
  %v48 = vld [vmem:[%s1 + $0x68] sm:$0xff]
  %v49 = vld [vmem:[%s1 + $0x70] sm:$0xff]
  %v50 = vld [vmem:[%s1 + $0x78] sm:$0xff]
  %v51 = vld [vmem:[%s2] sm:$0x1]
  %v53 = vlaneseq
  %v54 = vshrl.u32 %v53, 7
  %v55 = vsub.s32 0, %v54
  %v56 = vrot.slane %v51, %v55
  %58 = vmatprep.subr.mxu0 0.0
  %59 = vmatpush1.msra.mxu0 %v35
  %60 = vmatprep.subr.mxu0 0.0
  %61 = vmatpush1.msra.mxu0 %v36
  %62 = vmatprep.subr.mxu0 0.0
  %63 = vmatpush1.msra.mxu0 %v37
  %64 = vmatprep.subr.mxu0 0.0
  %65 = vmatpush1.msra.mxu0 %v38
  %66 = vmatprep.subr.mxu0 0.0
  %67 = vmatpush1.msra.mxu0 %v39
  %68 = vmatprep.subr.mxu0 0.0
  %69 = vmatpush1.msra.mxu0 %v40
  %70 = vmatprep.subr.mxu0 0.0
  %71 = vmatpush1.msra.mxu0 %v41
  %72 = vmatprep.subr.mxu0 0.0
  %73 = vmatpush1.msra.mxu0 %v42
  %74 = vmatprep.subr.mxu0 0.0
  %75 = vmatpush1.msra.mxu0 %v43
  %76 = vmatprep.subr.mxu0 0.0
  %77 = vmatpush1.msra.mxu0 %v44
  %78 = vmatprep.subr.mxu0 0.0
  %79 = vmatpush1.msra.mxu0 %v45
  %80 = vmatprep.subr.mxu0 0.0
  %81 = vmatpush1.msra.mxu0 %v46
  %82 = vmatprep.subr.mxu0 0.0
  %83 = vmatpush1.msra.mxu0 %v47
  %84 = vmatprep.subr.mxu0 0.0
  %85 = vmatpush1.msra.mxu0 %v48
  %86 = vmatprep.subr.mxu0 0.0
  %87 = vmatpush1.msra.mxu0 %v49
  %88 = vmatprep.subr.mxu0 0.0
  %89 = vmatpush1.msra.mxu0 %v50
  %90 = vmatprep.subr.mxu0 0.0
  %91 = vmatpush1.msra.mxu0 0.0
  %92 = vmatprep.subr.mxu0 0.0
  %93 = vmatpush1.msra.mxu0 0.0
  %94 = vmatprep.subr.mxu0 0.0
  %95 = vmatpush1.msra.mxu0 0.0
  %96 = vmatprep.subr.mxu0 0.0
  %97 = vmatpush1.msra.mxu0 0.0
  %98 = vmatprep.subr.mxu0 0.0
  %99 = vmatpush1.msra.mxu0 0.0
  %100 = vmatprep.subr.mxu0 0.0
  %101 = vmatpush1.msra.mxu0 0.0
  %102 = vmatprep.subr.mxu0 0.0
  %103 = vmatpush1.msra.mxu0 0.0
  %104 = vmatprep.subr.mxu0 0.0
  %105 = vmatpush1.msra.mxu0 0.0
  %106 = vmatprep.subr.mxu0 0.0
  %107 = vmatpush1.msra.mxu0 0.0
  %108 = vmatprep.subr.mxu0 0.0
  %109 = vmatpush1.msra.mxu0 0.0
  %110 = vmatprep.subr.mxu0 0.0
  %111 = vmatpush1.msra.mxu0 0.0
  %112 = vmatprep.subr.mxu0 0.0
  %113 = vmatpush1.msra.mxu0 0.0
  %114 = vmatprep.subr.mxu0 0.0
  %115 = vmatpush1.msra.mxu0 0.0
  %116 = vmatprep.subr.mxu0 0.0
  %117 = vmatpush1.msra.mxu0 0.0
  %118 = vmatprep.subr.mxu0 0.0
  %119 = vmatpush1.msra.mxu0 0.0
  %120 = vmatprep.subr.mxu0 0.0
  %121 = vmatpush1.msra.mxu0 0.0
  %122 = vmatprep.mubr.f32.mxu0 0.0
  %123 = vmatmul.mubr.f32.gmra.mrb[0].mxu0 %v33
  %v124 = vpop.f32.mrb[0].mxu0
  %v125 = vadd.f32 %v56, %v124
  %v126 = vpop.f32.mrb[0].mxu0
  %127 = vmatprep.mubr.f32.mxu0 0.0
  %128 = vmatmul.mubr.f32.gmra.mrb[0].mxu0 %v34
  %v129 = vpop.f32.mrb[0].mxu0
  %v130 = vadd.f32 %v56, %v129
  %v131 = vpop.f32.mrb[0].mxu0
  %132 = vdwg.mxu0
  %v133 = vmax.f32 %v125, 0.0
  %v134 = vmax.f32 %v130, 0.0
  %v135 = vld [vmem:[#allocation2] sm:$0xff]
  %v136 = vld [vmem:[#allocation2 + $0x8] sm:$0xff]
  %v137 = vld [vmem:[%s3] sm:$0xff]
  %v138 = vld [vmem:[%s3 + $0x8] sm:$0xff]
  %v139 = vld [vmem:[%s3 + $0x10] sm:$0xff]
  %v140 = vld [vmem:[%s3 + $0x18] sm:$0xff]
  %v141 = vld [vmem:[%s3 + $0x20] sm:$0xff]
  %v142 = vld [vmem:[%s3 + $0x28] sm:$0xff]
  %v143 = vld [vmem:[%s3 + $0x30] sm:$0xff]
  %v144 = vld [vmem:[%s3 + $0x38] sm:$0xff]
  %v145 = vld [vmem:[%s3 + $0x40] sm:$0xff]
  %v146 = vld [vmem:[%s3 + $0x48] sm:$0xff]
  %v147 = vld [vmem:[%s3 + $0x50] sm:$0xff]
  %v148 = vld [vmem:[%s3 + $0x58] sm:$0xff]
  %v149 = vld [vmem:[%s3 + $0x60] sm:$0xff]
  %v150 = vld [vmem:[%s3 + $0x68] sm:$0xff]
  %v151 = vld [vmem:[%s3 + $0x70] sm:$0xff]
  %v152 = vld [vmem:[%s3 + $0x78] sm:$0xff]
  %153 = vmatprep.subr.mxu0 0.0
  %154 = vmatpush1.msra.mxu0 %v137
  %155 = vmatprep.subr.mxu0 0.0
  %156 = vmatpush1.msra.mxu0 %v138
  %157 = vmatprep.subr.mxu0 0.0
  %158 = vmatpush1.msra.mxu0 %v139
  %159 = vmatprep.subr.mxu0 0.0
  %160 = vmatpush1.msra.mxu0 %v140
  %161 = vmatprep.subr.mxu0 0.0
  %162 = vmatpush1.msra.mxu0 %v141
  %163 = vmatprep.subr.mxu0 0.0
  %164 = vmatpush1.msra.mxu0 %v142
  %165 = vmatprep.subr.mxu0 0.0
  %166 = vmatpush1.msra.mxu0 %v143
  %167 = vmatprep.subr.mxu0 0.0
  %168 = vmatpush1.msra.mxu0 %v144
  %169 = vmatprep.subr.mxu0 0.0
  %170 = vmatpush1.msra.mxu0 %v145
  %171 = vmatprep.subr.mxu0 0.0
  %172 = vmatpush1.msra.mxu0 %v146
  %173 = vmatprep.subr.mxu0 0.0
  %174 = vmatpush1.msra.mxu0 %v147
  %175 = vmatprep.subr.mxu0 0.0
  %176 = vmatpush1.msra.mxu0 %v148
  %177 = vmatprep.subr.mxu0 0.0
  %178 = vmatpush1.msra.mxu0 %v149
  %179 = vmatprep.subr.mxu0 0.0
  %180 = vmatpush1.msra.mxu0 %v150
  %181 = vmatprep.subr.mxu0 0.0
  %182 = vmatpush1.msra.mxu0 %v151
  %183 = vmatprep.subr.mxu0 0.0
  %184 = vmatpush1.msra.mxu0 %v152
  %185 = vmatprep.subr.mxu0 0.0
  %186 = vmatpush1.msra.mxu0 0.0
  %187 = vmatprep.subr.mxu0 0.0
  %188 = vmatpush1.msra.mxu0 0.0
  %189 = vmatprep.subr.mxu0 0.0
  %190 = vmatpush1.msra.mxu0 0.0
  %191 = vmatprep.subr.mxu0 0.0
  %192 = vmatpush1.msra.mxu0 0.0
  %193 = vmatprep.subr.mxu0 0.0
  %194 = vmatpush1.msra.mxu0 0.0
  %195 = vmatprep.subr.mxu0 0.0
  %196 = vmatpush1.msra.mxu0 0.0
  %197 = vmatprep.subr.mxu0 0.0
  %198 = vmatpush1.msra.mxu0 0.0
  %199 = vmatprep.subr.mxu0 0.0
  %200 = vmatpush1.msra.mxu0 0.0
  %201 = vmatprep.subr.mxu0 0.0
  %202 = vmatpush1.msra.mxu0 0.0
  %203 = vmatprep.subr.mxu0 0.0
  %204 = vmatpush1.msra.mxu0 0.0
  %205 = vmatprep.subr.mxu0 0.0
  %206 = vmatpush1.msra.mxu0 0.0
  %207 = vmatprep.subr.mxu0 0.0
  %208 = vmatpush1.msra.mxu0 0.0
  %209 = vmatprep.subr.mxu0 0.0
  %210 = vmatpush1.msra.mxu0 0.0
  %211 = vmatprep.subr.mxu0 0.0
  %212 = vmatpush1.msra.mxu0 0.0
  %213 = vmatprep.subr.mxu0 0.0
  %214 = vmatpush1.msra.mxu0 0.0
  %215 = vmatprep.subr.mxu0 0.0
  %216 = vmatpush1.msra.mxu0 0.0
  %217 = vmatprep.mubr.f32.mxu0 0.0
  %218 = vmatmul.mubr.f32.gmra.mrb[0].mxu0 %v133
  %v219 = vpop.f32.mrb[0].mxu0
  %v220 = vadd.f32 0.0, %v219
  %v221 = vpop.f32.mrb[0].mxu0
  %222 = vmatprep.mubr.f32.mxu0 0.0
  %223 = vmatmul.mubr.f32.gmra.mrb[0].mxu0 %v134
  %v224 = vpop.f32.mrb[0].mxu0
  %v225 = vadd.f32 0.0, %v224
  %v226 = vpop.f32.mrb[0].mxu0
  %227 = vdwg.mxu0
  %v228 = vadd.f32 %v135, %v220
  %v229 = vadd.f32 %v136, %v225
  %230 = vst [vmem:[#allocation2] sm:$0xff] %v228
  %231 = vst [vmem:[#allocation2 + $0x8] sm:$0xff] %v229
  // Predicated region
  $region26: #{feed_forward.1} parent=0 // pred_check
    %p232 = pneg %p20
  $region27: #{feed_forward.1} parent=0 // pred_check_branch
    %234 = sbr.rel (%p232) target = $region29
  $region28: #{feed_forward.1} parent=0 // pred_region
    %v235 = vld [vmem:[#allocation2] sm:$0xff]
    %v236 = vld [vmem:[#allocation2 + $0x8] sm:$0xff]
    %237 = vst [vmem:[%s5] sm:$0xff] %v235
    %238 = vst [vmem:[%s5 + $0x8] sm:$0xff] %v236
  $region29: #{feed_forward.1} parent=0 // pred_fallthru
    _
  // Predicated region
  $region30: #{feed_forward.1} parent=0 // pred_check
    _
  $region31: #{feed_forward.1} parent=0 // pred_check_branch
    %240 = sbr.rel (0) target = $region33
  $region32: #{feed_forward.1} parent=0 // pred_region
    _
  $region33: #{feed_forward.1} parent=0 // pred_fallthru
    _
  // Predicated region
  $region34: #{feed_forward.1} parent=0 // pred_check
    _
  $region35: #{feed_forward.1} parent=0 // pred_check_branch
    %242 = sbr.rel (0) target = $region37
  $region36: #{feed_forward.1} parent=0 // pred_region
    _
  $region37: #{feed_forward.1} parent=0 // pred_fallthru
    _

</llo_original>
